<compile_context>
chip_gen: v5e
topology: v5e:2x2
jax: 0.10.0
libtpu: 0.0.40
codegen_flags: <defaults>
</compile_context>

<pallas_src>
import functools
import numpy as np
import jax
import jax.numpy as jnp
from jax import lax
from jax.experimental import pallas as pl
from jax.experimental.pallas import tpu as pltpu

LANE = 128
SUBLANE = 8
TARGET_BLOCK_BYTES = 2 * 1024 * 1024  # ~2 MiB input block per grid step


# ----------------------------------------------------------------------------
# Kernel: per-(batch, spatial-tile) block, LayerNorm over channel axis (axis 0
# of the squeezed block).  Works for both (C, TS) and (C, TS8, 128) blocks.
# ----------------------------------------------------------------------------
def _img_ch_layernorm_kernel(x_ref, g_ref, b_ref, o_ref, *, eps, inv_c):
    x = x_ref[0].astype(jnp.float32)                        # (C, ...) block
    # Pass 1: mean over channels (axis 0 -> no 128-lane XLU reduce).
    mu = jnp.sum(x, axis=0, keepdims=True) * inv_c
    # Pass 2: centered variance (numerically stable), then normalize + affine.
    xc = x - mu
    var = jnp.sum(xc * xc, axis=0, keepdims=True) * inv_c
    y = xc * lax.rsqrt(var + eps)
    y = y * g_ref[...] + b_ref[...]                          # per-channel affine
    o_ref[0] = y.astype(o_ref.dtype)


# ----------------------------------------------------------------------------
# Tile planning: byte-budgeted, lane/sublane-dense, bounded blocks.
# ----------------------------------------------------------------------------
def _plan_tiles(B, C, HW, itemsize):
    """Returns (layout, spatial_extent, tile) where tile indexes that extent."""
    if HW >= LANE and HW % LANE == 0:
        # Lane-dense 4D layout: spatial axis is (rows, 128); tile over rows.
        rows = HW // LANE
        bytes_per_row = max(C * LANE * itemsize, 1)
        ts = max(TARGET_BLOCK_BYTES // bytes_per_row, 1)
        if B == 1 and rows >= 2 * SUBLANE:
            ts = min(ts, max(rows // 2, SUBLANE))   # keep >=2 steps for megacore
        if ts >= rows:
            ts = rows                                # full extent (always legal)
        else:
            ts = max((ts // SUBLANE) * SUBLANE, SUBLANE)
        return "4d", rows, ts
    # Fallback 3D layout: tile the flat spatial axis in 128-multiples.
    if HW <= LANE:
        return "3d", HW, HW
    bytes_per_pos = max(C * itemsize, 1)
    ts = max(TARGET_BLOCK_BYTES // bytes_per_pos, LANE)
    if B == 1 and HW >= 2 * LANE:
        ts = min(ts, max(HW // 2, LANE))
    if ts >= HW:
        ts = HW                                       # full extent (always legal)
    else:
        ts = max((ts // LANE) * LANE, LANE)           # 128-multiple, ragged tail ok
    return "3d", HW, ts


# ----------------------------------------------------------------------------
# Wrapper: ImgChLayerNorm.forward
# ----------------------------------------------------------------------------
def img_ch_layer_norm(x, weight, bias, *, eps=1e-3):
    """x: (B, C, H, W) NCHW.  weight/bias: (C,).  Returns NCHW."""
    B, C, H, W = x.shape
    HW = H * W
    itemsize = jnp.dtype(x.dtype).itemsize

    layout, extent, ts = _plan_tiles(B, C, HW, itemsize)
    n_sp = pl.cdiv(extent, ts)

    if layout == "4d":
        x_r = x.reshape(B, C, extent, LANE)                  # free view
        g_r = weight.reshape(C, 1, 1).astype(jnp.float32)
        b_r = bias.reshape(C, 1, 1).astype(jnp.float32)
        blk = (1, C, ts, LANE)
        x_map = lambda b, s: (b, 0, s, 0)
        gb_blk = (C, 1, 1)
        gb_map = lambda b, s: (0, 0, 0)
        out_sds = jax.ShapeDtypeStruct((B, C, extent, LANE), x.dtype)
        block_elems = C * ts * LANE
    else:
        x_r = x.reshape(B, C, HW)                            # free view
        g_r = weight.reshape(C, 1).astype(jnp.float32)
        b_r = bias.reshape(C, 1).astype(jnp.float32)
        blk = (1, C, ts)
        x_map = lambda b, s: (b, 0, s)
        gb_blk = (C, 1)
        gb_map = lambda b, s: (0, 0)
        out_sds = jax.ShapeDtypeStruct((B, C, HW), x.dtype)
        block_elems = C * ts

    # VMEM budget: double-buffered in + out blocks, full-block f32 temporaries
    # (x, xc), plus padded weight/bias blocks.  Capped well under v7x's 64 MiB.
    io_bytes = block_elems * itemsize
    temp_bytes = 2 * block_elems * 4
    need = 2 * (io_bytes + io_bytes) + temp_bytes + 4 * C * SUBLANE * LANE
    vmem_limit = int(min(max(2 * need, 8 << 20), 32 << 20))

    kern = functools.partial(_img_ch_layernorm_kernel, eps=float(eps),
                             inv_c=1.0 / float(C))

    out = pl.pallas_call(
        kern,
        out_shape=out_sds,
        grid=(B, n_sp),
        in_specs=[
            pl.BlockSpec(blk, x_map),        # activations
            pl.BlockSpec(gb_blk, gb_map),    # LN weight (constant block)
            pl.BlockSpec(gb_blk, gb_map),    # LN bias   (constant block)
        ],
        out_specs=pl.BlockSpec(blk, x_map),
        compiler_params=pltpu.CompilerParams(
            dimension_semantics=("parallel", "parallel"),
            vmem_limit_bytes=vmem_limit,
        ),
        cost_estimate=pl.CostEstimate(
            flops=int(8 * B * C * HW),
            transcendentals=int(B * HW),
            bytes_accessed=int(2 * B * C * HW * itemsize + 2 * C * 4),
        ),
    )(x_r, g_r, b_r)
    return out.reshape(B, C, H, W)


# ----------------------------------------------------------------------------
# Pure-numpy reference (mirrors the PyTorch module exactly).
# ----------------------------------------------------------------------------
def numpy_reference(x, weight, bias, eps=1e-3):
    xn = np.asarray(x, np.float64)                 # (B, C, H, W)
    xt = np.transpose(xn, (0, 2, 3, 1))            # NHWC
    mu = xt.mean(-1, keepdims=True)
    var = ((xt - mu) ** 2).mean(-1, keepdims=True)  # biased, like torch LN
    y = (xt - mu) / np.sqrt(var + eps)
    y = y * np.asarray(weight, np.float64) + np.asarray(bias, np.float64)
    return np.transpose(y, (0, 3, 1, 2))           # back to NCHW


if __name__ == "__main__":
    key = jax.random.PRNGKey(0)
    k1, k2, k3, k4 = jax.random.split(key, 4)

    fwd = jax.jit(functools.partial(img_ch_layer_norm, eps=1e-3))

    # Primary test: (2, 4, 16, 16) -> HW = 256 (4D lane-dense path, C=4 dense).
    B, C, H, W = 2, 4, 16, 16
    x = jax.random.normal(k1, (B, C, H, W), jnp.float32)
    g = 1.0 + 0.5 * jax.random.normal(k2, (C,), jnp.float32)
    b = 0.1 * jax.random.normal(k3, (C,), jnp.float32)
    y = jax.block_until_ready(fwd(x, g, b))
    assert y.shape == (B, C, H, W), y.shape
    ref = numpy_reference(x, g, b)
    err = float(np.max(np.abs(np.asarray(y, np.float64) - ref)))
    assert np.allclose(np.asarray(y, np.float64), ref, rtol=1e-3, atol=1e-3), err

    # Secondary test: more channels, small spatial extent (3D full-row path).
    B2, C2, H2, W2 = 2, 32, 8, 8
    x2 = jax.random.normal(k4, (B2, C2, H2, W2), jnp.float32)
    g2 = jnp.ones((C2,), jnp.float32)
    b2 = jnp.zeros((C2,), jnp.float32)
    y2 = jax.block_until_ready(fwd(x2, g2, b2))
    ref2 = numpy_reference(x2, g2, b2)
    err2 = float(np.max(np.abs(np.asarray(y2, np.float64) - ref2)))
    assert np.allclose(np.asarray(y2, np.float64), ref2, rtol=1e-3, atol=1e-3), err2

    print("KERNEL_OK")
</pallas_src>

<mosaic_0001>
module attributes {stable_mosaic.version = 11 : i64} {
  func.func @_img_ch_layernorm_kernel(%arg0: i32, %arg1: i32, %arg2: memref<1x4x2x128xf32, #tpu.memory_space<vmem>>, %arg3: memref<4x1x1xf32, #tpu.memory_space<vmem>>, %arg4: memref<4x1x1xf32, #tpu.memory_space<vmem>>, %arg5: memref<1x4x2x128xf32, #tpu.memory_space<vmem>>) attributes {dimension_semantics = [#tpu.dimension_semantics<parallel>, #tpu.dimension_semantics<parallel>], iteration_bounds = array<i64: 2, 1>, scalar_prefetch = 0 : i64, scratch_operands = 0 : i64, tpu.core_type = #tpu.core_type<tc>, window_params = [{transform_indices = @transform_0, window_bounds = array<i64: 1, 4, 2, 128>}, {pipeline_mode = #tpu.pipeline_mode<synchronous>, transform_indices = @transform_1, window_bounds = array<i64: 4, 1, 1>}, {pipeline_mode = #tpu.pipeline_mode<synchronous>, transform_indices = @transform_2, window_bounds = array<i64: 4, 1, 1>}, {transform_indices = @transform_3, window_bounds = array<i64: 1, 4, 2, 128>}]} {
    %c0 = arith.constant 0 : index
    %c0_0 = arith.constant 0 : index
    %c0_1 = arith.constant 0 : index
    %c0_2 = arith.constant 0 : index
    %0 = vector.load %arg2[%c0, %c0_0, %c0_1, %c0_2] : memref<1x4x2x128xf32, #tpu.memory_space<vmem>>, vector<1x4x2x128xf32>
    %1 = vector.shape_cast %0 : vector<1x4x2x128xf32> to vector<4x2x128xf32>
    %cst = arith.constant dense<0.000000e+00> : vector<2x128xf32>
    %2 = vector.multi_reduction <add>, %1, %cst [0] : vector<4x2x128xf32> to vector<2x128xf32>
    %3 = vector.shape_cast %2 : vector<2x128xf32> to vector<1x2x128xf32>
    %cst_3 = arith.constant 2.500000e-01 : f32
    %4 = vector.broadcast %cst_3 : f32 to vector<1x2x128xf32>
    %5 = arith.mulf %3, %4 : vector<1x2x128xf32>
    %6 = vector.broadcast %5 : vector<1x2x128xf32> to vector<4x2x128xf32>
    %7 = arith.subf %1, %6 : vector<4x2x128xf32>
    %8 = arith.mulf %7, %7 : vector<4x2x128xf32>
    %cst_4 = arith.constant dense<0.000000e+00> : vector<2x128xf32>
    %9 = vector.multi_reduction <add>, %8, %cst_4 [0] : vector<4x2x128xf32> to vector<2x128xf32>
    %10 = vector.shape_cast %9 : vector<2x128xf32> to vector<1x2x128xf32>
    %cst_5 = arith.constant 2.500000e-01 : f32
    %11 = vector.broadcast %cst_5 : f32 to vector<1x2x128xf32>
    %12 = arith.mulf %10, %11 : vector<1x2x128xf32>
    %cst_6 = arith.constant 1.000000e-03 : f32
    %13 = vector.broadcast %cst_6 : f32 to vector<1x2x128xf32>
    %14 = arith.addf %12, %13 : vector<1x2x128xf32>
    %15 = math.rsqrt %14 : vector<1x2x128xf32>
    %16 = vector.broadcast %15 : vector<1x2x128xf32> to vector<4x2x128xf32>
    %17 = arith.mulf %7, %16 : vector<4x2x128xf32>
    %c0_7 = arith.constant 0 : index
    %c0_8 = arith.constant 0 : index
    %c0_9 = arith.constant 0 : index
    %18 = vector.load %arg3[%c0_7, %c0_8, %c0_9] : memref<4x1x1xf32, #tpu.memory_space<vmem>>, vector<4x1x1xf32>
    %19 = vector.broadcast %18 : vector<4x1x1xf32> to vector<4x2x128xf32>
    %20 = arith.mulf %17, %19 : vector<4x2x128xf32>
    %c0_10 = arith.constant 0 : index
    %c0_11 = arith.constant 0 : index
    %c0_12 = arith.constant 0 : index
    %21 = vector.load %arg4[%c0_10, %c0_11, %c0_12] : memref<4x1x1xf32, #tpu.memory_space<vmem>>, vector<4x1x1xf32>
    %22 = vector.broadcast %21 : vector<4x1x1xf32> to vector<4x2x128xf32>
    %23 = arith.addf %20, %22 : vector<4x2x128xf32>
    %c0_13 = arith.constant 0 : index
    %c0_14 = arith.constant 0 : index
    %c0_15 = arith.constant 0 : index
    %c0_16 = arith.constant 0 : index
    %24 = vector.load %arg5[%c0_13, %c0_14, %c0_15, %c0_16] : memref<1x4x2x128xf32, #tpu.memory_space<vmem>>, vector<1x4x2x128xf32>
    %25 = vector.shape_cast %24 : vector<1x4x2x128xf32> to vector<4x2x128xf32>
    %26 = vector.shape_cast %23 : vector<4x2x128xf32> to vector<1x4x2x128xf32>
    tpu.vector_store %arg5[%c0_13, %c0_14, %c0_15, %c0_16], %26 {strides = array<i32>} : memref<1x4x2x128xf32, #tpu.memory_space<vmem>>, vector<1x4x2x128xf32>,
    return
  }
  func.func @transform_0(%arg0: i32, %arg1: i32) -> (i32, i32, i32, i32) {
    %c0_i32 = arith.constant 0 : i32
    %c0_i32_0 = arith.constant 0 : i32
    %c0_i32_1 = arith.constant 0 : i32
    return %arg0, %c0_i32, %arg1, %c0_i32_0 : i32, i32, i32, i32
  }
  func.func @transform_1(%arg0: i32, %arg1: i32) -> (i32, i32, i32) {
    %c0_i32 = arith.constant 0 : i32
    %c0_i32_0 = arith.constant 0 : i32
    %c0_i32_1 = arith.constant 0 : i32
    %c0_i32_2 = arith.constant 0 : i32
    return %c0_i32, %c0_i32_0, %c0_i32_1 : i32, i32, i32
  }
  func.func @transform_2(%arg0: i32, %arg1: i32) -> (i32, i32, i32) {
    %c0_i32 = arith.constant 0 : i32
    %c0_i32_0 = arith.constant 0 : i32
    %c0_i32_1 = arith.constant 0 : i32
    %c0_i32_2 = arith.constant 0 : i32
    return %c0_i32, %c0_i32_0, %c0_i32_1 : i32, i32, i32
  }
  func.func @transform_3(%arg0: i32, %arg1: i32) -> (i32, i32, i32, i32) {
    %c0_i32 = arith.constant 0 : i32
    %c0_i32_0 = arith.constant 0 : i32
    %c0_i32_1 = arith.constant 0 : i32
    return %arg0, %c0_i32, %arg1, %c0_i32_0 : i32, i32, i32, i32
  }
}

</mosaic_0001>

<llo_original>
// kernel: img_ch_layer_norm.1
$region0: #{img_ch_layer_norm.1}
  #allocation0 [shape = 'u32[]', space=smem, size = 0x4, offset = 0x4, fixed_abs, tag = 'smem constant byte address 0x4 - core index']
  #allocation1 [shape = 'u32[72,128]{1,0:T(1,128)}', space=vmem, size = 0x9000, scoped, tag = 'internal scratch']
  %s0 = inlined_call_operand.vmem [shape: f32[2,4,2,128], index: 0, kind: input, shape index: {}]
  %s1 = inlined_call_operand.vmem [shape: f32[4,1,1], index: 1, kind: input, shape index: {}]
  %s2 = inlined_call_operand.vmem [shape: f32[4,1,1], index: 2, kind: input, shape index: {}]
  %s3 = inlined_call_operand.vmem [shape: f32[2,4,2,128], index: 3, kind: output, shape index: {}]
  %s4 = sld [smem:[#allocation0]]
  $region45: #{img_ch_layer_norm.1} parent=0
    _
  %s6 = ssub.s32 1, %s4
  %s7 = scalar_select 0, %s6, %s4
  loop: start=0, step=1, limit=4
  $region2: #{img_ch_layer_norm.1} parent=0 // loop_pre_header
    _
  $region3: #{img_ch_layer_norm.1} parent=0 // loop_header
    %s9 = sphi 0, %s13
    %p10 = scmp.ge.s32.totalorder %s9, 4
    %s16 = sphi 0, %s28
    %s17 = sphi 0, %s24
    %s18 = sphi 0, %s16
    %s19 = sphi 0, %s17
    %s20 = sphi 0, %s18
    %s21 = sphi 0, %s19
    %s33 = sphi 0, %s35
    %s36 = sphi 0, %s33
    %s37 = sphi 0, %s36
    %s53 = sphi 0, %s37
    %s57 = sphi 0, %s57
    %s59 = sphi 0, %s57
    %s60 = sphi 0, %s59
    %s74 = sphi 0, %s60
    %s78 = sphi 0, %s78
    %s80 = sphi 0, %s78
    %s81 = sphi 0, %s80
    %s95 = sphi 0, %s81
    %s103 = sphi 0, %s105
    %s106 = sphi 0, %s103
    %s107 = sphi 0, %s106
    %s123 = sphi 0, %s107
  $region4: #{img_ch_layer_norm.1} parent=0 // loop_header_branch
    %12 = sbr.rel (%p10) target = $region8
  $region5: #{img_ch_layer_norm.1} parent=0 // loop_body
    %s14 = ssub.s32 %s9, 1
    %s15 = ssub.s32 %s9, 2
    %s22 = sadd.s32 1, %s17
    %p23 = scmp.ge.s32.totalorder %s22, 1
    %s24 = scalar_select %p23, 0, %s22
    %s25 = sadd.s32 1, %s16
    %s26 = scalar_select %p23, %s25, %s16
    %p27 = scmp.ge.s32.totalorder %s26, 2
    %s28 = scalar_select %p27, 0, %s26
    %s29 = ssub.s32 %s16, %s28
    %s30 = ssub.s32 %s17, %s24
    %s31 = sor.u32 %s29, %s30
    %p32 = scmp.eq.s32.totalorder %s31, 0
    %s34 = sadd.s32 %s33, 1
    %s35 = scalar_select %p32, %s33, %s34
    %p38 = pneg %p32
    %p39 = scmp.eq.s32.totalorder %s9, 1
    %p40 = por %p38, %p39
    %p41 = scmp.ne.s32.totalorder %s33, %s36
    %p42 = scmp.eq.s32.totalorder %s9, 0
    %p43 = por %p41, %p42
    %p44 = scmp.ne.s32.totalorder %s33, %s36
    %p45 = scmp.eq.s32.totalorder %s14, 1
    %p46 = por %p44, %p45
    %p47 = scmp.ne.s32.totalorder %s36, %s37
    %p48 = scmp.eq.s32.totalorder %s14, 0
    %p49 = por %p47, %p48
    %p50 = scmp.ne.s32.totalorder %s36, %s37
    %p51 = scmp.eq.s32.totalorder %s15, 1
    %p52 = por %p50, %p51
    %p54 = scmp.ne.s32.totalorder %s37, %s53
    %p55 = scmp.eq.s32.totalorder %s15, 0
    %p56 = por %p54, %p55
    %s58 = sadd.s32 %s57, 1
    %p61 = scmp.eq.s32.totalorder %s9, 1
    %p62 = scmp.ne.s32.totalorder %s57, %s59
    %p63 = scmp.eq.s32.totalorder %s9, 0
    %p64 = por %p62, %p63
    %p65 = scmp.ne.s32.totalorder %s57, %s59
    %p66 = scmp.eq.s32.totalorder %s14, 1
    %p67 = por %p65, %p66
    %p68 = scmp.ne.s32.totalorder %s59, %s60
    %p69 = scmp.eq.s32.totalorder %s14, 0
    %p70 = por %p68, %p69
    %p71 = scmp.ne.s32.totalorder %s59, %s60
    %p72 = scmp.eq.s32.totalorder %s15, 1
    %p73 = por %p71, %p72
    %p75 = scmp.ne.s32.totalorder %s60, %s74
    %p76 = scmp.eq.s32.totalorder %s15, 0
    %p77 = por %p75, %p76
    %s79 = sadd.s32 %s78, 1
    %p82 = scmp.eq.s32.totalorder %s9, 1
    %p83 = scmp.ne.s32.totalorder %s78, %s80
    %p84 = scmp.eq.s32.totalorder %s9, 0
    %p85 = por %p83, %p84
    %p86 = scmp.ne.s32.totalorder %s78, %s80
    %p87 = scmp.eq.s32.totalorder %s14, 1
    %p88 = por %p86, %p87
    %p89 = scmp.ne.s32.totalorder %s80, %s81
    %p90 = scmp.eq.s32.totalorder %s14, 0
    %p91 = por %p89, %p90
    %p92 = scmp.ne.s32.totalorder %s80, %s81
    %p93 = scmp.eq.s32.totalorder %s15, 1
    %p94 = por %p92, %p93
    %p96 = scmp.ne.s32.totalorder %s81, %s95
    %p97 = scmp.eq.s32.totalorder %s15, 0
    %p98 = por %p96, %p97
    %s99 = ssub.s32 %s16, %s28
    %s100 = ssub.s32 %s17, %s24
    %s101 = sor.u32 %s99, %s100
    %p102 = scmp.eq.s32.totalorder %s101, 0
    %s104 = sadd.s32 %s103, 1
    %s105 = scalar_select %p102, %s103, %s104
    %p108 = pneg %p102
    %p109 = scmp.eq.s32.totalorder %s9, 1
    %p110 = por %p108, %p109
    %p111 = scmp.ne.s32.totalorder %s103, %s106
    %p112 = scmp.eq.s32.totalorder %s9, 0
    %p113 = por %p111, %p112
    %p114 = scmp.ne.s32.totalorder %s103, %s106
    %p115 = scmp.eq.s32.totalorder %s14, 1
    %p116 = por %p114, %p115
    %p117 = scmp.ne.s32.totalorder %s106, %s107
    %p118 = scmp.eq.s32.totalorder %s14, 0
    %p119 = por %p117, %p118
    %p120 = scmp.ne.s32.totalorder %s106, %s107
    %p121 = scmp.eq.s32.totalorder %s15, 1
    %p122 = por %p120, %p121
    %p124 = scmp.ne.s32.totalorder %s107, %s123
    %p125 = scmp.eq.s32.totalorder %s15, 0
    %p126 = por %p124, %p125
    %p127 = scmp.le.s32.totalorder 1, %s9
    %p128 = scmp.lt.s32.totalorder %s9, 3
    %p129 = pnand %p127, %p128
    %p130 = pneg %p129
    // Predicated region
    $region9: #{img_ch_layer_norm.1} parent=5 // pred_check
      _
    $region10: #{img_ch_layer_norm.1} parent=5 // pred_check_branch
      %132 = sbr.rel (%p129) target = $region12
    $region11: #{img_ch_layer_norm.1} parent=5 // pred_region
      %s133 = ssub.s32 %s9, 1
      // Predicated region
      $region13: #{img_ch_layer_norm.1} parent=11 // pred_check
        %p134 = pneg %p70
      $region14: #{img_ch_layer_norm.1} parent=11 // pred_check_branch
        %136 = sbr.rel (%p134) target = $region16
      $region15: #{img_ch_layer_norm.1} parent=11 // pred_region
        _
      $region16: #{img_ch_layer_norm.1} parent=11 // pred_fallthru
        _
      // Predicated region
      $region17: #{img_ch_layer_norm.1} parent=11 // pred_check
        %p137 = pneg %p91
      $region18: #{img_ch_layer_norm.1} parent=11 // pred_check_branch
        %139 = sbr.rel (%p137) target = $region20
      $region19: #{img_ch_layer_norm.1} parent=11 // pred_region
        _
      $region20: #{img_ch_layer_norm.1} parent=11 // pred_fallthru
        _
    $region12: #{img_ch_layer_norm.1} parent=5 // pred_fallthru
      _
    %p140 = scmp.lt.s32.totalorder %s9, 2
    // Predicated region
    $region21: #{img_ch_layer_norm.1} parent=5 // pred_check
      %p141 = pneg %p140
    $region22: #{img_ch_layer_norm.1} parent=5 // pred_check_branch
      %143 = sbr.rel (%p141) target = $region24
    $region23: #{img_ch_layer_norm.1} parent=5 // pred_region
      // Predicated region
      $region25: #{img_ch_layer_norm.1} parent=23 // pred_check
        %p144 = pneg %p43
      $region26: #{img_ch_layer_norm.1} parent=23 // pred_check_branch
        %146 = sbr.rel (%p144) target = $region28
      $region27: #{img_ch_layer_norm.1} parent=23 // pred_region
        %p147 = scmp.lt.s32.totalorder %s16, 1
        %s148 = scalar_select %p147, %s16, 1
        %p149 = scmp.lt.s32.totalorder %s17, 0
        %s150 = scalar_select %p149, %s17, 0
        %s151 = smul.addr %s148, 4
        %s152 = sadd.s32 %s150, %s151
        %s153 = smul.addr %s152, 2
        %s154 = scalar_lea.vmem %s0, %s153
      $region28: #{img_ch_layer_norm.1} parent=23 // pred_fallthru
        _
    $region24: #{img_ch_layer_norm.1} parent=5 // pred_fallthru
      _
    %p155 = scmp.le.s32.totalorder 1, %s9
    %p156 = scmp.lt.s32.totalorder %s9, 3
    %p157 = pnand %p155, %p156
    %p158 = pneg %p157
    // Predicated region
    $region29: #{img_ch_layer_norm.1} parent=5 // pred_check
      _
    $region30: #{img_ch_layer_norm.1} parent=5 // pred_check_branch
      %160 = sbr.rel (%p157) target = $region32
    $region31: #{img_ch_layer_norm.1} parent=5 // pred_region
      %s161 = ssub.s32 %s9, 1
      %p162 = scmp.lt.s32.totalorder %s18, 1
      %s163 = scalar_select %p162, %s18, 1
      %p164 = scmp.lt.s32.totalorder %s19, 0
      %s165 = scalar_select %p164, %s19, 0
      %s166 = smul.addr %s163, 4
      %s167 = sadd.s32 %s165, %s166
      %s168 = smul.addr %s167, 2
      %s169 = scalar_lea.vmem %s0, %s168
      %p170 = pneg %p49
      %p171 = pneg %p46
      %p172 = pneg %p70
      %p173 = pneg %p67
      %p174 = pneg %p91
      %p175 = pneg %p88
      %p176 = pneg %p119
      %p177 = pneg %p116
      %p178 = scmp.lt.s32.totalorder %s18, 1
      %s179 = scalar_select %p178, %s18, 1
      %p180 = scmp.lt.s32.totalorder %s19, 0
      %s181 = scalar_select %p180, %s19, 0
      %s182 = smul.addr %s179, 4
      %s183 = sadd.s32 %s181, %s182
      %s184 = smul.addr %s183, 2
      %s185 = scalar_lea.vmem %s3, %s184
      %p186 = scmp.lt.s32.totalorder %s18, 1
      %s187 = scalar_select %p186, %s18, 1
      %p188 = scmp.lt.s32.totalorder %s19, 0
      %s189 = scalar_select %p188, %s19, 0
      %s190 = smul.addr %s187, 4
      %s191 = sadd.s32 %s189, %s190
      %s192 = smul.addr %s191, 2
      %s193 = scalar_lea.vmem %s0, %s192
      %p194 = scmp.lt.s32.totalorder %s18, 1
      %s195 = scalar_select %p194, %s18, 1
      %p196 = scmp.lt.s32.totalorder %s19, 0
      %s197 = scalar_select %p196, %s19, 0
      %s198 = smul.addr %s195, 4
      %s199 = sadd.s32 %s197, %s198
      %s200 = smul.addr %s199, 2
      %s201 = scalar_lea.vmem %s3, %s200
      %v202 = vld [vmem:[%s193] sm:$0x3]
      %v203 = vld [vmem:[%s193 + $0x2] sm:$0x3]
      %v204 = vld [vmem:[%s193 + $0x4] sm:$0x3]
      %v205 = vld [vmem:[%s193 + $0x6] sm:$0x3]
      %vm206 = vcmask 1041408
      %v207 = vsel %vm206, %v202, 0.0
      %v208 = vsel %vm206, %v203, 0.0
      %v209 = vadd.f32 %v207, %v208
      %v210 = vsel %vm206, %v204, 0.0
      %v211 = vadd.f32 %v209, %v210
      %v212 = vsel %vm206, %v205, 0.0
      %v213 = vadd.f32 %v211, %v212
      %v214 = vmul.f32 %v213, 0.25
      %v215 = vsub.f32 %v202, %v214
      %v216 = vsub.f32 %v203, %v214
      %v217 = vsub.f32 %v204, %v214
      %v218 = vsub.f32 %v205, %v214
      %v219 = vmul.f32 %v215, %v215
      %v220 = vmul.f32 %v216, %v216
      %v221 = vmul.f32 %v217, %v217
      %v222 = vmul.f32 %v218, %v218
      %v223 = vsel %vm206, %v219, 0.0
      %v224 = vsel %vm206, %v220, 0.0
      %v225 = vadd.f32 %v223, %v224
      %v226 = vsel %vm206, %v221, 0.0
      %v227 = vadd.f32 %v225, %v226
      %v228 = vsel %vm206, %v222, 0.0
      %v229 = vadd.f32 %v227, %v228
      %v230 = vmul.f32 %v229, 0.25
      %v231 = vadd.f32 %v230, 0.001
      %v232 = vrsqrt.pop %v231
      %v233 = vmul.f32 %v232, %v231
      %v234 = vmul.f32 %v233, %v232
      %v235 = vmul.f32 0.5, %v234
      %v236 = vsub.f32 1.5, %v235
      %v237 = vmul.f32 %v232, %v236
      %vm238 = vweird.f32 %v231
      %vm239 = vweird.f32 %v232
      %vm240 = vmor %vm238, %vm239
      %v241 = vsel %vm240, %v232, %v237
      %v242 = vmul.f32 %v215, %v241
      %v243 = vmul.f32 %v216, %v241
      %v244 = vmul.f32 %v217, %v241
      %v245 = vmul.f32 %v218, %v241
      %v246 = vld [vmem:[%s1] sm:$0x1]
      %v247 = vld [vmem:[%s1 + $0x1] sm:$0x1]
      %v248 = vld [vmem:[%s1 + $0x2] sm:$0x1]
      %v249 = vld [vmem:[%s1 + $0x3] sm:$0x1]
      %v254 = vperm.slane %v246, 0
      %v255 = vperm.slane %v247, 0
      %v256 = vperm.slane %v248, 0
      %v257 = vperm.slane %v249, 0
      %258 = vset.pattern.permute.xlu0 0
      %259 = vperm.xlu0 %258, %v254
      %v260 = vpop.permute.xlu0 %259
      %262 = vset.pattern.permute.xlu0 0
      %263 = vperm.xlu0 %262, %v255
      %v264 = vpop.permute.xlu0 %263
      %266 = vset.pattern.permute.xlu0 0
      %267 = vperm.xlu0 %266, %v256
      %v268 = vpop.permute.xlu0 %267
      %270 = vset.pattern.permute.xlu0 0
      %271 = vperm.xlu0 %270, %v257
      %v272 = vpop.permute.xlu0 %271
      %v274 = vmul.f32 %v242, %v260
      %v275 = vmul.f32 %v243, %v264
      %v276 = vmul.f32 %v244, %v268
      %v277 = vmul.f32 %v245, %v272
      %v278 = vld [vmem:[%s2] sm:$0x1]
      %v279 = vld [vmem:[%s2 + $0x1] sm:$0x1]
      %v280 = vld [vmem:[%s2 + $0x2] sm:$0x1]
      %v281 = vld [vmem:[%s2 + $0x3] sm:$0x1]
      %v286 = vperm.slane %v278, 0
      %v287 = vperm.slane %v279, 0
      %v288 = vperm.slane %v280, 0
      %v289 = vperm.slane %v281, 0
      %290 = vset.pattern.permute.xlu0 0
      %291 = vperm.xlu0 %290, %v286
      %v292 = vpop.permute.xlu0 %291
      %294 = vset.pattern.permute.xlu0 0
      %295 = vperm.xlu0 %294, %v287
      %v296 = vpop.permute.xlu0 %295
      %298 = vset.pattern.permute.xlu0 0
      %299 = vperm.xlu0 %298, %v288
      %v300 = vpop.permute.xlu0 %299
      %302 = vset.pattern.permute.xlu0 0
      %303 = vperm.xlu0 %302, %v289
      %v304 = vpop.permute.xlu0 %303
      %v306 = vadd.f32 %v274, %v292
      %v307 = vadd.f32 %v275, %v296
      %v308 = vadd.f32 %v276, %v300
      %v309 = vadd.f32 %v277, %v304
      %310 = vst [vmem:[%s201] sm:$0x3] %v306
      %311 = vst [vmem:[%s201 + $0x2] sm:$0x3] %v307
      %312 = vst [vmem:[%s201 + $0x4] sm:$0x3] %v308
      %313 = vst [vmem:[%s201 + $0x6] sm:$0x3] %v309
      %p314 = scmp.lt.s32.totalorder %s18, 1
      %s315 = scalar_select %p314, %s18, 1
      %p316 = scmp.lt.s32.totalorder %s19, 0
      %s317 = scalar_select %p316, %s19, 0
      %s318 = smul.addr %s315, 4
      %s319 = sadd.s32 %s317, %s318
      %s320 = smul.addr %s319, 2
      %s321 = scalar_lea.vmem %s3, %s320
      // Predicated region
      $region33: #{img_ch_layer_norm.1} parent=31 // pred_check
        %p322 = pneg %p116
      $region34: #{img_ch_layer_norm.1} parent=31 // pred_check_branch
        %324 = sbr.rel (%p322) target = $region36
      $region35: #{img_ch_layer_norm.1} parent=31 // pred_region
        _
      $region36: #{img_ch_layer_norm.1} parent=31 // pred_fallthru
        _
    $region32: #{img_ch_layer_norm.1} parent=5 // pred_fallthru
      _
    %p325 = scmp.le.s32.totalorder 2, %s9
    // Predicated region
    $region37: #{img_ch_layer_norm.1} parent=5 // pred_check
      %p326 = pneg %p325
    $region38: #{img_ch_layer_norm.1} parent=5 // pred_check_branch
      %328 = sbr.rel (%p326) target = $region40
    $region39: #{img_ch_layer_norm.1} parent=5 // pred_region
      %s329 = ssub.s32 %s9, 2
      // Predicated region
      $region41: #{img_ch_layer_norm.1} parent=39 // pred_check
        %p330 = pneg %p122
      $region42: #{img_ch_layer_norm.1} parent=39 // pred_check_branch
        %332 = sbr.rel (%p330) target = $region44
      $region43: #{img_ch_layer_norm.1} parent=39 // pred_region
        %p333 = scmp.lt.s32.totalorder %s20, 1
        %s334 = scalar_select %p333, %s20, 1
        %p335 = scmp.lt.s32.totalorder %s21, 0
        %s336 = scalar_select %p335, %s21, 0
        %s337 = smul.addr %s334, 4
        %s338 = sadd.s32 %s336, %s337
        %s339 = smul.addr %s338, 2
        %s340 = scalar_lea.vmem %s3, %s339
      $region44: #{img_ch_layer_norm.1} parent=39 // pred_fallthru
        _
    $region40: #{img_ch_layer_norm.1} parent=5 // pred_fallthru
      _
  $region6: #{img_ch_layer_norm.1} parent=0 // loop_footer
    %s13 = sadd.s32 1, %s9
  $region7: #{img_ch_layer_norm.1} parent=0 // loop_footer_branch
    %8 = sbr.rel target = $region3
  $region8: #{img_ch_layer_norm.1} parent=0 // loop_exit
    _

</llo_original>
